<compile_context>
chip_gen: v7x
topology: tpu7x:2x2x1
jax: 0.10.0
libtpu: 0.0.40
codegen_flags: <defaults>
</compile_context>

<pallas_src>
import functools

import jax
import jax.numpy as jnp
from jax.experimental import pallas as pl
from jax.experimental.pallas import tpu as pltpu

_LANE = 128
_SUBLANE = 8
_TARGET_BLOCK_BYTES = 4 * 1024 * 1024   # per-input block; x2 inputs x2 pipeline buffers ~ 16 MiB
_IGNORE_INDEX = -100.0                  # SoftBCEWithLogitsLoss default


def _partial_sums_kernel(x_ref, t_ref, out_ref, *, tile_rows, valid_rows, needs_mask):
    """x_ref/t_ref: (1, C, tile_rows, 128) blocks.  out_ref: (1, 4, C, 128) resident accumulator.

    out_ref[0, 0] = sum(p*t), [0, 1] = sum(p), [0, 2] = sum(t), [0, 3] = sum(bce),
    each reduced over (batch-slice, rows) and kept lane-resident (final lane reduce in wrapper).
    """
    j = pl.program_id(1)

    @pl.when(j == 0)
    def _init():
        out_ref[...] = jnp.zeros_like(out_ref)

    x = x_ref[...].astype(jnp.float32)
    t = t_ref[...].astype(jnp.float32)

    # 2 EUP pushes / element (tanh + log), exact:
    #   s = sigmoid(|x|);  sigmoid(x) = where(x>=0, s, 1-s);  log1p(exp(-|x|)) = -log(s)
    s = 0.5 + 0.5 * jnp.tanh(0.5 * jnp.abs(x))
    p = jnp.where(x >= 0.0, s, 1.0 - s)
    bce = jnp.maximum(x, 0.0) - x * t - jnp.log(s)
    bce = jnp.where(t != _IGNORE_INDEX, bce, 0.0)   # ignored elems zeroed, stay in mean denom
    pt = p * t

    if needs_mask:
        # Ragged trailing block only: rows >= valid_rows hold garbage.  Cheap 2-D
        # (tile_rows, 1) row mask broadcast over classes/lanes; select is NaN-safe.
        row = j * tile_rows + jax.lax.broadcasted_iota(jnp.int32, (tile_rows, 1), 0)
        valid = row < valid_rows
        p = jnp.where(valid, p, 0.0)
        t = jnp.where(valid, t, 0.0)
        pt = jnp.where(valid, pt, 0.0)
        bce = jnp.where(valid, bce, 0.0)

    # Lane-preserving reductions: mostly vreg-aligned VALU adds.
    out_ref[0, 0] += jnp.sum(pt, axis=(0, 2))
    out_ref[0, 1] += jnp.sum(p, axis=(0, 2))
    out_ref[0, 2] += jnp.sum(t, axis=(0, 2))
    out_ref[0, 3] += jnp.sum(bce, axis=(0, 2))


def _pick_tile_rows(R, row_bytes, target_bytes):
    """Rows-of-128 per block.  Prefer an exact divisor of R so no tile is ragged."""
    if R * row_bytes <= target_bytes:
        return R, False
    max_tile = max(_SUBLANE, (target_bytes // row_bytes) // _SUBLANE * _SUBLANE)
    if max_tile >= R:
        return R, False
    if R % _SUBLANE == 0:
        d = max_tile
        while d >= _SUBLANE and d * 4 >= max_tile:   # accept divisors within 4x of target
            if R % d == 0:
                return d, False
            d -= _SUBLANE
    return max_tile, (R % max_tile != 0)             # rare: masked ragged trailing block


def dice_bce_loss(logits, targets, dice_weight=1.0, bce_weight=1.0,
                  dice_smooth=1e-6, dice_eps=1e-7,
                  target_block_bytes=_TARGET_BLOCK_BYTES):
    """logits, targets: (N, C, H, W).  Returns a scalar float32 loss."""
    N, C, H, W = logits.shape
    M = H * W
    total_count = float(N * C * M)

    lg = logits.reshape(N, C, M)
    tg = targets.reshape(N, C, M)
    if M % _LANE != 0:
        # Rare non-lane-aligned case: one-time pad.  logits=-100 saturates the sigmoid
        # (p == 0 exactly, -log(s) == 0 exactly) and targets=0, so padded elements
        # contribute exactly zero to every partial sum.  Denominators use the true M.
        pad = _LANE - (M % _LANE)
        lg = jnp.pad(lg, ((0, 0), (0, 0), (0, pad)), constant_values=-100.0)
        tg = jnp.pad(tg, ((0, 0), (0, 0), (0, pad)), constant_values=0.0)
    R = lg.shape[-1] // _LANE
    lg = lg.reshape(N, C, R, _LANE)
    tg = tg.reshape(N, C, R, _LANE)

    itemsize = max(lg.dtype.itemsize, tg.dtype.itemsize)
    row_bytes = C * _LANE * itemsize
    tile_rows, needs_mask = _pick_tile_rows(R, row_bytes, int(target_block_bytes))
    num_tiles = pl.cdiv(R, tile_rows)

    kernel = functools.partial(
        _partial_sums_kernel,
        tile_rows=int(tile_rows),
        valid_rows=int(R),
        needs_mask=bool(needs_mask),
    )

    in_block = (1, C, tile_rows, _LANE)
    in_map = lambda n, j: (n, 0, j, 0)

    partials = pl.pallas_call(
        kernel,
        out_shape=jax.ShapeDtypeStruct((N, 4, C, _LANE), jnp.float32),
        grid_spec=pltpu.PrefetchScalarGridSpec(
            num_scalar_prefetch=0,
            grid=(N, num_tiles),
            in_specs=[pl.BlockSpec(in_block, in_map),
                      pl.BlockSpec(in_block, in_map)],
            out_specs=pl.BlockSpec((1, 4, C, _LANE), lambda n, j: (n, 0, 0, 0)),
        ),
        compiler_params=pltpu.CompilerParams(
            # Batch axis "parallel": on 2-TensorCore parts each core reduces its own
            # batch slice into its own output block; pixel-tile axis is the reduction.
            dimension_semantics=("parallel", "arbitrary"),
        ),
    )(lg, tg)

    # Tiny epilogue on (4, C) sums (combines per-core / per-batch partials).
    sums = jnp.sum(partials, axis=(0, 3))            # (4, C)
    inter, psum, tsum, bce_sum = sums[0], sums[1], sums[2], sums[3]
    card = psum + tsum
    score = (2.0 * inter + dice_smooth) / jnp.maximum(card + dice_smooth, dice_eps)
    dice_per_class = jnp.where(tsum > 0.0, 1.0 - score, 0.0)
    dice_loss = jnp.mean(dice_per_class)
    bce_loss = jnp.sum(bce_sum) / total_count
    return dice_weight * dice_loss + bce_weight * bce_loss


def _reference(logits, targets, dice_weight=1.0, bce_weight=1.0,
               dice_smooth=1e-6, dice_eps=1e-7):
    """Pure-JAX reference of the same math."""
    N, C = logits.shape[:2]
    lg = logits.reshape(N, C, -1).astype(jnp.float32)
    tg = targets.reshape(N, C, -1).astype(jnp.float32)
    p = jax.nn.sigmoid(lg)
    inter = jnp.sum(p * tg, axis=(0, 2))
    card = jnp.sum(p + tg, axis=(0, 2))
    score = (2.0 * inter + dice_smooth) / jnp.maximum(card + dice_smooth, dice_eps)
    tsum = jnp.sum(tg, axis=(0, 2))
    dice = jnp.mean(jnp.where(tsum > 0.0, 1.0 - score, 0.0))
    bce = jnp.maximum(lg, 0.0) - lg * tg + jnp.log1p(jnp.exp(-jnp.abs(lg)))
    bce = jnp.where(tg != _IGNORE_INDEX, bce, 0.0)
    return dice_weight * dice + bce_weight * jnp.mean(bce)


if __name__ == "__main__":
    key = jax.random.PRNGKey(0)

    cases = [
        dict(shape=(2, 4, 32, 32)),                              # aligned, single block
        dict(shape=(2, 4, 16, 16), with_ignore=True),            # aligned, exercises ignore_index=-100
        dict(shape=(2, 4, 10, 13)),                              # non-lane-aligned -> zero-contribution pad
        dict(shape=(2, 4, 48, 64), target_block_bytes=16384),    # multi-tile, exact-divisor (no mask)
        dict(shape=(2, 4, 24, 64), target_block_bytes=16384),    # multi-tile, masked ragged trailing tile
        dict(shape=(2, 4, 32, 32), logits_dtype=jnp.bfloat16),   # bf16 logits, f32 accumulation
    ]

    for case in cases:
        shape = case["shape"]
        logits_dtype = case.get("logits_dtype", jnp.float32)
        key, k1, k2, k3 = jax.random.split(key, 4)
        logits = (2.0 * jax.random.normal(k1, shape, dtype=jnp.float32)).astype(logits_dtype)
        targets = (jax.random.uniform(k2, shape) > 0.5).astype(jnp.float32)
        if case.get("with_ignore", False):
            targets = jnp.where(jax.random.uniform(k3, shape) < 0.1, _IGNORE_INDEX, targets)

        kwargs = {}
        if "target_block_bytes" in case:
            kwargs["target_block_bytes"] = case["target_block_bytes"]

        loss = jax.block_until_ready(dice_bce_loss(logits, targets, **kwargs))
        ref = jax.block_until_ready(_reference(logits, targets))
        assert jnp.allclose(loss, ref, rtol=5e-4, atol=1e-5), (shape, float(loss), float(ref))

    print("KERNEL_OK")
</pallas_src>

<mosaic_0001>
module attributes {stable_mosaic.version = 11 : i64} {
  func.func @_partial_sums_kernel(%arg0: i32, %arg1: i32, %arg2: memref<1x4x8x128xf32, #tpu.memory_space<vmem>>, %arg3: memref<1x4x8x128xf32, #tpu.memory_space<vmem>>, %arg4: memref<1x4x4x128xf32, #tpu.memory_space<vmem>>) attributes {dimension_semantics = [#tpu.dimension_semantics<parallel>, #tpu.dimension_semantics<arbitrary>], iteration_bounds = array<i64: 2, 1>, scalar_prefetch = 0 : i64, scratch_operands = 0 : i64, tpu.core_type = #tpu.core_type<tc>, window_params = [{transform_indices = @transform_0, window_bounds = array<i64: 1, 4, 8, 128>}, {transform_indices = @transform_1, window_bounds = array<i64: 1, 4, 8, 128>}, {transform_indices = @transform_2, window_bounds = array<i64: 1, 4, 4, 128>}]} {
    %c0_i32 = arith.constant 0 : i32
    %0 = arith.cmpi eq, %arg1, %c0_i32 : i32
    %1 = arith.extui %0 : i1 to i32
    %c0_i32_0 = arith.constant 0 : i32
    %2 = arith.cmpi ne, %1, %c0_i32_0 : i32
    scf.if %2 {
      %cst_48 = arith.constant 0.000000e+00 : f32
      %57 = vector.broadcast %cst_48 : f32 to vector<1x4x4x128xf32>
      %c0_49 = arith.constant 0 : index
      %c0_50 = arith.constant 0 : index
      %c0_51 = arith.constant 0 : index
      %c0_52 = arith.constant 0 : index
      %58 = vector.load %arg4[%c0_49, %c0_50, %c0_51, %c0_52] : memref<1x4x4x128xf32, #tpu.memory_space<vmem>>, vector<1x4x4x128xf32>
      tpu.vector_store %arg4[%c0_49, %c0_50, %c0_51, %c0_52], %57 {strides = array<i32>} : memref<1x4x4x128xf32, #tpu.memory_space<vmem>>, vector<1x4x4x128xf32>,
    } else {
    }
    %c0 = arith.constant 0 : index
    %c0_1 = arith.constant 0 : index
    %c0_2 = arith.constant 0 : index
    %c0_3 = arith.constant 0 : index
    %3 = vector.load %arg2[%c0, %c0_1, %c0_2, %c0_3] : memref<1x4x8x128xf32, #tpu.memory_space<vmem>>, vector<1x4x8x128xf32>
    %c0_4 = arith.constant 0 : index
    %c0_5 = arith.constant 0 : index
    %c0_6 = arith.constant 0 : index
    %c0_7 = arith.constant 0 : index
    %4 = vector.load %arg3[%c0_4, %c0_5, %c0_6, %c0_7] : memref<1x4x8x128xf32, #tpu.memory_space<vmem>>, vector<1x4x8x128xf32>
    %5 = math.absf %3 : vector<1x4x8x128xf32>
    %cst = arith.constant 5.000000e-01 : f32
    %6 = vector.broadcast %cst : f32 to vector<1x4x8x128xf32>
    %7 = arith.mulf %6, %5 : vector<1x4x8x128xf32>
    %8 = math.tanh %7 : vector<1x4x8x128xf32>
    %cst_8 = arith.constant 5.000000e-01 : f32
    %9 = vector.broadcast %cst_8 : f32 to vector<1x4x8x128xf32>
    %10 = arith.mulf %9, %8 : vector<1x4x8x128xf32>
    %cst_9 = arith.constant 5.000000e-01 : f32
    %11 = vector.broadcast %cst_9 : f32 to vector<1x4x8x128xf32>
    %12 = arith.addf %11, %10 : vector<1x4x8x128xf32>
    %cst_10 = arith.constant 0.000000e+00 : f32
    %13 = vector.broadcast %cst_10 : f32 to vector<1x4x8x128xf32>
    %14 = arith.cmpf oge, %3, %13 : vector<1x4x8x128xf32>
    %cst_11 = arith.constant 1.000000e+00 : f32
    %15 = vector.broadcast %cst_11 : f32 to vector<1x4x8x128xf32>
    %16 = arith.subf %15, %12 : vector<1x4x8x128xf32>
    %17 = arith.select %14, %12, %16 : vector<1x4x8x128xi1>, vector<1x4x8x128xf32>
    %cst_12 = arith.constant 0.000000e+00 : f32
    %18 = vector.broadcast %cst_12 : f32 to vector<1x4x8x128xf32>
    %19 = arith.maximumf %3, %18 : vector<1x4x8x128xf32>
    %20 = arith.mulf %3, %4 : vector<1x4x8x128xf32>
    %21 = arith.subf %19, %20 : vector<1x4x8x128xf32>
    %22 = math.log %12 : vector<1x4x8x128xf32>
    %23 = arith.subf %21, %22 : vector<1x4x8x128xf32>
    %cst_13 = arith.constant -1.000000e+02 : f32
    %24 = vector.broadcast %cst_13 : f32 to vector<1x4x8x128xf32>
    %25 = arith.cmpf one, %4, %24 : vector<1x4x8x128xf32>
    %cst_14 = arith.constant 0.000000e+00 : f32
    %26 = vector.broadcast %cst_14 : f32 to vector<1x4x8x128xf32>
    %27 = arith.select %25, %23, %26 : vector<1x4x8x128xi1>, vector<1x4x8x128xf32>
    %28 = arith.mulf %17, %4 : vector<1x4x8x128xf32>
    %c0_15 = arith.constant 0 : index
    %c0_16 = arith.constant 0 : index
    %c0_17 = arith.constant 0 : index
    %c0_18 = arith.constant 0 : index
    %29 = vector.load %arg4[%c0_15, %c0_16, %c0_17, %c0_18] : memref<1x4x4x128xf32, #tpu.memory_space<vmem>>, vector<1x1x4x128xf32>
    %30 = vector.shape_cast %29 : vector<1x1x4x128xf32> to vector<4x128xf32>
    %cst_19 = arith.constant dense<0.000000e+00> : vector<4x128xf32>
    %31 = vector.multi_reduction <add>, %28, %cst_19 [0, 2] : vector<1x4x8x128xf32> to vector<4x128xf32>
    %32 = arith.addf %30, %31 : vector<4x128xf32>
    %c0_20 = arith.constant 0 : index
    %c0_21 = arith.constant 0 : index
    %c0_22 = arith.constant 0 : index
    %c0_23 = arith.constant 0 : index
    %33 = vector.load %arg4[%c0_20, %c0_21, %c0_22, %c0_23] : memref<1x4x4x128xf32, #tpu.memory_space<vmem>>, vector<1x1x4x128xf32>
    %34 = vector.shape_cast %33 : vector<1x1x4x128xf32> to vector<4x128xf32>
    %35 = vector.shape_cast %32 : vector<4x128xf32> to vector<1x1x4x128xf32>
    tpu.vector_store %arg4[%c0_20, %c0_21, %c0_22, %c0_23], %35 {strides = array<i32>} : memref<1x4x4x128xf32, #tpu.memory_space<vmem>>, vector<1x1x4x128xf32>,
    %c0_24 = arith.constant 0 : index
    %c1 = arith.constant 1 : index
    %c0_25 = arith.constant 0 : index
    %c0_26 = arith.constant 0 : index
    %36 = vector.load %arg4[%c0_24, %c1, %c0_25, %c0_26] : memref<1x4x4x128xf32, #tpu.memory_space<vmem>>, vector<1x1x4x128xf32>
    %37 = vector.shape_cast %36 : vector<1x1x4x128xf32> to vector<4x128xf32>
    %cst_27 = arith.constant dense<0.000000e+00> : vector<4x128xf32>
    %38 = vector.multi_reduction <add>, %17, %cst_27 [0, 2] : vector<1x4x8x128xf32> to vector<4x128xf32>
    %39 = arith.addf %37, %38 : vector<4x128xf32>
    %c0_28 = arith.constant 0 : index
    %c1_29 = arith.constant 1 : index
    %c0_30 = arith.constant 0 : index
    %c0_31 = arith.constant 0 : index
    %40 = vector.load %arg4[%c0_28, %c1_29, %c0_30, %c0_31] : memref<1x4x4x128xf32, #tpu.memory_space<vmem>>, vector<1x1x4x128xf32>
    %41 = vector.shape_cast %40 : vector<1x1x4x128xf32> to vector<4x128xf32>
    %42 = vector.shape_cast %39 : vector<4x128xf32> to vector<1x1x4x128xf32>
    tpu.vector_store %arg4[%c0_28, %c1_29, %c0_30, %c0_31], %42 {strides = array<i32>} : memref<1x4x4x128xf32, #tpu.memory_space<vmem>>, vector<1x1x4x128xf32>,
    %c0_32 = arith.constant 0 : index
    %c2 = arith.constant 2 : index
    %c0_33 = arith.constant 0 : index
    %c0_34 = arith.constant 0 : index
    %43 = vector.load %arg4[%c0_32, %c2, %c0_33, %c0_34] : memref<1x4x4x128xf32, #tpu.memory_space<vmem>>, vector<1x1x4x128xf32>
    %44 = vector.shape_cast %43 : vector<1x1x4x128xf32> to vector<4x128xf32>
    %cst_35 = arith.constant dense<0.000000e+00> : vector<4x128xf32>
    %45 = vector.multi_reduction <add>, %4, %cst_35 [0, 2] : vector<1x4x8x128xf32> to vector<4x128xf32>
    %46 = arith.addf %44, %45 : vector<4x128xf32>
    %c0_36 = arith.constant 0 : index
    %c2_37 = arith.constant 2 : index
    %c0_38 = arith.constant 0 : index
    %c0_39 = arith.constant 0 : index
    %47 = vector.load %arg4[%c0_36, %c2_37, %c0_38, %c0_39] : memref<1x4x4x128xf32, #tpu.memory_space<vmem>>, vector<1x1x4x128xf32>
    %48 = vector.shape_cast %47 : vector<1x1x4x128xf32> to vector<4x128xf32>
    %49 = vector.shape_cast %46 : vector<4x128xf32> to vector<1x1x4x128xf32>
    tpu.vector_store %arg4[%c0_36, %c2_37, %c0_38, %c0_39], %49 {strides = array<i32>} : memref<1x4x4x128xf32, #tpu.memory_space<vmem>>, vector<1x1x4x128xf32>,
    %c0_40 = arith.constant 0 : index
    %c3 = arith.constant 3 : index
    %c0_41 = arith.constant 0 : index
    %c0_42 = arith.constant 0 : index
    %50 = vector.load %arg4[%c0_40, %c3, %c0_41, %c0_42] : memref<1x4x4x128xf32, #tpu.memory_space<vmem>>, vector<1x1x4x128xf32>
    %51 = vector.shape_cast %50 : vector<1x1x4x128xf32> to vector<4x128xf32>
    %cst_43 = arith.constant dense<0.000000e+00> : vector<4x128xf32>
    %52 = vector.multi_reduction <add>, %27, %cst_43 [0, 2] : vector<1x4x8x128xf32> to vector<4x128xf32>
    %53 = arith.addf %51, %52 : vector<4x128xf32>
    %c0_44 = arith.constant 0 : index
    %c3_45 = arith.constant 3 : index
    %c0_46 = arith.constant 0 : index
    %c0_47 = arith.constant 0 : index
    %54 = vector.load %arg4[%c0_44, %c3_45, %c0_46, %c0_47] : memref<1x4x4x128xf32, #tpu.memory_space<vmem>>, vector<1x1x4x128xf32>
    %55 = vector.shape_cast %54 : vector<1x1x4x128xf32> to vector<4x128xf32>
    %56 = vector.shape_cast %53 : vector<4x128xf32> to vector<1x1x4x128xf32>
    tpu.vector_store %arg4[%c0_44, %c3_45, %c0_46, %c0_47], %56 {strides = array<i32>} : memref<1x4x4x128xf32, #tpu.memory_space<vmem>>, vector<1x1x4x128xf32>,
    return
  }
  func.func @transform_0(%arg0: i32, %arg1: i32) -> (i32, i32, i32, i32) {
    %c0_i32 = arith.constant 0 : i32
    %c0_i32_0 = arith.constant 0 : i32
    %c0_i32_1 = arith.constant 0 : i32
    return %arg0, %c0_i32, %arg1, %c0_i32_0 : i32, i32, i32, i32
  }
  func.func @transform_1(%arg0: i32, %arg1: i32) -> (i32, i32, i32, i32) {
    %c0_i32 = arith.constant 0 : i32
    %c0_i32_0 = arith.constant 0 : i32
    %c0_i32_1 = arith.constant 0 : i32
    return %arg0, %c0_i32, %arg1, %c0_i32_0 : i32, i32, i32, i32
  }
  func.func @transform_2(%arg0: i32, %arg1: i32) -> (i32, i32, i32, i32) {
    %c0_i32 = arith.constant 0 : i32
    %c0_i32_0 = arith.constant 0 : i32
    %c0_i32_1 = arith.constant 0 : i32
    %c0_i32_2 = arith.constant 0 : i32
    return %arg0, %c0_i32, %c0_i32_0, %c0_i32_1 : i32, i32, i32, i32
  }
}

</mosaic_0001>

<llo_original>
// kernel: tpu_custom_call.1
$region0: #{tpu_custom_call.1}
  #allocation0 [shape = 'u32[]', space=smem, size = 0x4, offset = 0x4, fixed_abs, tag = 'smem constant byte address 0x4 - core index']
  #allocation1 [shape = 'u32[144,128]{1,0:T(1,128)}', space=vmem, size = 0x12000, scoped, tag = 'internal scratch']
  %s0 = inlined_call_operand.hbm [shape: f32[2,4,8,128], index: 0, kind: input, shape index: {}]
  %s1 = inlined_call_operand.hbm [shape: f32[2,4,8,128], index: 1, kind: input, shape index: {}]
  %s2 = inlined_call_operand.hbm [shape: f32[2,4,4,128], index: 2, kind: output, shape index: {}]
  %s3 = sld [smem:[#allocation0]]
  $region53: #{tpu_custom_call.1} parent=0
    _
  %s5 = ssub.s32 1, %s3
  %s6 = scalar_select 0, %s5, %s3
  $region1: #{tpu_custom_call.1} parent=0
    #allocation2 [shape = 'u8[32768]{0}', space=vmem, size = 0x8000, scoped, tag = 'input window, operand 0']
    #allocation3 [shape = 's32[2]{0}', space=sflag, size = 0x8, scoped, tag = 'scoped memory for tpu_custom_call.1']
    #allocation4 [shape = 's32[2]{0}', space=sflag, size = 0x8, scoped, tag = 'scoped memory for tpu_custom_call.1']
    #allocation5 [shape = 'u8[32768]{0}', space=vmem, size = 0x8000, scoped, tag = 'input window, operand 1']
    #allocation6 [shape = 's32[2]{0}', space=sflag, size = 0x8, scoped, tag = 'scoped memory for tpu_custom_call.1']
    #allocation7 [shape = 'u8[16384]{0}', space=vmem, size = 0x4000, scoped, tag = 'output window, operand 0']
    %7 = vsyncpa [#allocation3], 0
    %s8 = scalar_lea.sflag [#allocation3], 1
    %9 = vsyncpa %s8, 0
    %10 = vsyncpa [#allocation6], 0
    %s11 = scalar_lea.sflag [#allocation6], 1
    %12 = vsyncpa %s11, 0
    %13 = vsyncpa [#allocation4], 0
    %s14 = scalar_lea.sflag [#allocation4], 1
    %15 = vsyncpa %s14, 0
    loop: start=0, step=1, limit=4
    $region2: #{tpu_custom_call.1} parent=1 // loop_pre_header
      _
    $region3: #{tpu_custom_call.1} parent=1 // loop_header
      %s17 = sphi 0, %s21
      %p18 = scmp.ge.s32.totalorder %s17, 4
      %s24 = sphi 0, %s36
      %s25 = sphi 0, %s32
      %s26 = sphi 0, %s24
      %s27 = sphi 0, %s25
      %s28 = sphi 0, %s26
      %s29 = sphi 0, %s27
      %s41 = sphi 0, %s43
      %s44 = sphi 0, %s41
      %s45 = sphi 0, %s44
      %s61 = sphi 0, %s45
      %s69 = sphi 0, %s71
      %s72 = sphi 0, %s69
      %s73 = sphi 0, %s72
      %s89 = sphi 0, %s73
      %s95 = sphi 0, %s97
      %s98 = sphi 0, %s95
      %s99 = sphi 0, %s98
      %s115 = sphi 0, %s99
    $region4: #{tpu_custom_call.1} parent=1 // loop_header_branch
      %20 = sbr.rel (%p18) target = $region8
    $region5: #{tpu_custom_call.1} parent=1 // loop_body
      %s22 = ssub.s32 %s17, 1
      %s23 = ssub.s32 %s17, 2
      %s30 = sadd.s32 1, %s25
      %p31 = scmp.ge.s32.totalorder %s30, 1
      %s32 = scalar_select %p31, 0, %s30
      %s33 = sadd.s32 1, %s24
      %s34 = scalar_select %p31, %s33, %s24
      %p35 = scmp.ge.s32.totalorder %s34, 2
      %s36 = scalar_select %p35, 0, %s34
      %s37 = ssub.s32 %s24, %s36
      %s38 = ssub.s32 %s25, %s32
      %s39 = sor.u32 %s37, %s38
      %p40 = scmp.eq.s32.totalorder %s39, 0
      %s42 = sadd.s32 %s41, 1
      %s43 = scalar_select %p40, %s41, %s42
      %p46 = pneg %p40
      %p47 = scmp.eq.s32.totalorder %s17, 1
      %p48 = por %p46, %p47
      %p49 = scmp.ne.s32.totalorder %s41, %s44
      %p50 = scmp.eq.s32.totalorder %s17, 0
      %p51 = por %p49, %p50
      %p52 = scmp.ne.s32.totalorder %s41, %s44
      %p53 = scmp.eq.s32.totalorder %s22, 1
      %p54 = por %p52, %p53
      %p55 = scmp.ne.s32.totalorder %s44, %s45
      %p56 = scmp.eq.s32.totalorder %s22, 0
      %p57 = por %p55, %p56
      %p58 = scmp.ne.s32.totalorder %s44, %s45
      %p59 = scmp.eq.s32.totalorder %s23, 1
      %p60 = por %p58, %p59
      %p62 = scmp.ne.s32.totalorder %s45, %s61
      %p63 = scmp.eq.s32.totalorder %s23, 0
      %p64 = por %p62, %p63
      %s65 = ssub.s32 %s24, %s36
      %s66 = ssub.s32 %s25, %s32
      %s67 = sor.u32 %s65, %s66
      %p68 = scmp.eq.s32.totalorder %s67, 0
      %s70 = sadd.s32 %s69, 1
      %s71 = scalar_select %p68, %s69, %s70
      %p74 = pneg %p68
      %p75 = scmp.eq.s32.totalorder %s17, 1
      %p76 = por %p74, %p75
      %p77 = scmp.ne.s32.totalorder %s69, %s72
      %p78 = scmp.eq.s32.totalorder %s17, 0
      %p79 = por %p77, %p78
      %p80 = scmp.ne.s32.totalorder %s69, %s72
      %p81 = scmp.eq.s32.totalorder %s22, 1
      %p82 = por %p80, %p81
      %p83 = scmp.ne.s32.totalorder %s72, %s73
      %p84 = scmp.eq.s32.totalorder %s22, 0
      %p85 = por %p83, %p84
      %p86 = scmp.ne.s32.totalorder %s72, %s73
      %p87 = scmp.eq.s32.totalorder %s23, 1
      %p88 = por %p86, %p87
      %p90 = scmp.ne.s32.totalorder %s73, %s89
      %p91 = scmp.eq.s32.totalorder %s23, 0
      %p92 = por %p90, %p91
      %s93 = ssub.s32 %s24, %s36
      %p94 = scmp.eq.s32.totalorder %s93, 0
      %s96 = sadd.s32 %s95, 1
      %s97 = scalar_select %p94, %s95, %s96
      %p100 = pneg %p94
      %p101 = scmp.eq.s32.totalorder %s17, 1
      %p102 = por %p100, %p101
      %p103 = scmp.ne.s32.totalorder %s95, %s98
      %p104 = scmp.eq.s32.totalorder %s17, 0
      %p105 = por %p103, %p104
      %p106 = scmp.ne.s32.totalorder %s95, %s98
      %p107 = scmp.eq.s32.totalorder %s22, 1
      %p108 = por %p106, %p107
      %p109 = scmp.ne.s32.totalorder %s98, %s99
      %p110 = scmp.eq.s32.totalorder %s22, 0
      %p111 = por %p109, %p110
      %p112 = scmp.ne.s32.totalorder %s98, %s99
      %p113 = scmp.eq.s32.totalorder %s23, 1
      %p114 = por %p112, %p113
      %p116 = scmp.ne.s32.totalorder %s99, %s115
      %p117 = scmp.eq.s32.totalorder %s23, 0
      %p118 = por %p116, %p117
      %p119 = scmp.le.s32.totalorder 1, %s17
      %p120 = scmp.lt.s32.totalorder %s17, 3
      %p121 = pnand %p119, %p120
      %p122 = pneg %p121
      // Predicated region
      $region9: #{tpu_custom_call.1} parent=5 // pred_check
        _
      $region10: #{tpu_custom_call.1} parent=5 // pred_check_branch
        %124 = sbr.rel (%p121) target = $region12
      $region11: #{tpu_custom_call.1} parent=5 // pred_region
        %s125 = ssub.s32 %s17, 1
      $region12: #{tpu_custom_call.1} parent=5 // pred_fallthru
        _
      %p126 = scmp.lt.s32.totalorder %s17, 2
      // Predicated region
      $region13: #{tpu_custom_call.1} parent=5 // pred_check
        %p127 = pneg %p126
      $region14: #{tpu_custom_call.1} parent=5 // pred_check_branch
        %129 = sbr.rel (%p127) target = $region16
      $region15: #{tpu_custom_call.1} parent=5 // pred_region
        // Predicated region
        $region17: #{tpu_custom_call.1} parent=15 // pred_check
          %p130 = pneg %p51
        $region18: #{tpu_custom_call.1} parent=15 // pred_check_branch
          %132 = sbr.rel (%p130) target = $region20
        $region19: #{tpu_custom_call.1} parent=15 // pred_region
          %s133 = sand.u32 %s41, 1
          %s134 = scalar_lea.sflag [#allocation3], %s133
          %s135 = sand.u32 %s41, 1
          %s136 = smul.addr %s135, 32
          %s137 = scalar_lea.vmem [#allocation2], %s136
          %s139 = ssub.s32 512, 512
          %140 = vsyncadd %s134, %s139
          %s141 = smul.addr %s24, 4
          %s142 = sadd.s32 %s25, %s141
          %s143 = smul.addr %s142, 128
          %s144 = scalar_lea.hbm %s0, %s143
          %s145 = sshll.u32 %s137, 4
          %s146 = int_to_ptr.vmem [resolvable:$true] %s145
          %151 = dma.hbm_to_vmem [thread:$0]  %s144, 512, %s146, %s134, 128, 128, 8
        $region20: #{tpu_custom_call.1} parent=15 // pred_fallthru
          _
        // Predicated region
        $region21: #{tpu_custom_call.1} parent=15 // pred_check
          %p152 = pneg %p79
        $region22: #{tpu_custom_call.1} parent=15 // pred_check_branch
          %154 = sbr.rel (%p152) target = $region24
        $region23: #{tpu_custom_call.1} parent=15 // pred_region
          %s155 = sand.u32 %s69, 1
          %s156 = scalar_lea.sflag [#allocation6], %s155
          %s157 = sand.u32 %s69, 1
          %s158 = smul.addr %s157, 32
          %s159 = scalar_lea.vmem [#allocation5], %s158
          %s161 = ssub.s32 512, 512
          %162 = vsyncadd %s156, %s161
          %s163 = smul.addr %s24, 4
          %s164 = sadd.s32 %s25, %s163
          %s165 = smul.addr %s164, 128
          %s166 = scalar_lea.hbm %s1, %s165
          %s167 = sshll.u32 %s159, 4
          %s168 = int_to_ptr.vmem [resolvable:$true] %s167
          %173 = dma.hbm_to_vmem [thread:$0]  %s166, 512, %s168, %s156, 128, 128, 8
        $region24: #{tpu_custom_call.1} parent=15 // pred_fallthru
          _
      $region16: #{tpu_custom_call.1} parent=5 // pred_fallthru
        _
      %p174 = scmp.le.s32.totalorder 1, %s17
      %p175 = scmp.lt.s32.totalorder %s17, 3
      %p176 = pnand %p174, %p175
      %p177 = pneg %p176
      // Predicated region
      $region25: #{tpu_custom_call.1} parent=5 // pred_check
        _
      $region26: #{tpu_custom_call.1} parent=5 // pred_check_branch
        %179 = sbr.rel (%p176) target = $region28
      $region27: #{tpu_custom_call.1} parent=5 // pred_region
        %s180 = ssub.s32 %s17, 1
        %s181 = sand.u32 %s44, 1
        %s182 = scalar_lea.sflag [#allocation3], %s181
        %s183 = sand.u32 %s44, 1
        %s184 = smul.addr %s183, 32
        %s185 = scalar_lea.vmem [#allocation2], %s184
        // Predicated region
        $region29: #{tpu_custom_call.1} parent=27 // pred_check
          %p186 = pneg %p57
        $region30: #{tpu_custom_call.1} parent=27 // pred_check_branch
          %188 = sbr.rel (%p186) target = $region32
        $region31: #{tpu_custom_call.1} parent=27 // pred_region
          %189 = dma.done %s182, 512
        $region32: #{tpu_custom_call.1} parent=27 // pred_fallthru
          _
        %s190 = sand.u32 %s72, 1
        %s191 = scalar_lea.sflag [#allocation6], %s190
        %s192 = sand.u32 %s72, 1
        %s193 = smul.addr %s192, 32
        %s194 = scalar_lea.vmem [#allocation5], %s193
        // Predicated region
        $region33: #{tpu_custom_call.1} parent=27 // pred_check
          %p195 = pneg %p85
        $region34: #{tpu_custom_call.1} parent=27 // pred_check_branch
          %197 = sbr.rel (%p195) target = $region36
        $region35: #{tpu_custom_call.1} parent=27 // pred_region
          %198 = dma.done %s191, 512
        $region36: #{tpu_custom_call.1} parent=27 // pred_fallthru
          _
        %s199 = sand.u32 %s44, 1
        %s200 = scalar_lea.sflag [#allocation3], %s199
        %s201 = sand.u32 %s44, 1
        %s202 = smul.addr %s201, 32
        %s203 = scalar_lea.vmem [#allocation2], %s202
        %p204 = pneg %p57
        %p205 = pneg %p54
        %s206 = sand.u32 %s72, 1
        %s207 = scalar_lea.sflag [#allocation6], %s206
        %s208 = sand.u32 %s72, 1
        %s209 = smul.addr %s208, 32
        %s210 = scalar_lea.vmem [#allocation5], %s209
        %p211 = pneg %p85
        %p212 = pneg %p82
        %p213 = pneg %p111
        %p214 = pneg %p108
        %s215 = sand.u32 %s98, 1
        %s216 = scalar_lea.sflag [#allocation4], %s215
        %s217 = sand.u32 %s98, 1
        %s218 = smul.addr %s217, 16
        %s219 = scalar_lea.vmem [#allocation7], %s218
        %p220 = scmp.eq.s32.totalorder %s27, 0
        // Predicated region
        $region37: #{tpu_custom_call.1} parent=27 // pred_check
          %p221 = pneg %p220
        $region38: #{tpu_custom_call.1} parent=27 // pred_check_branch
          %223 = sbr.rel (%p221) target = $region40
        $region39: #{tpu_custom_call.1} parent=27 // pred_region
          %224 = vst [vmem:[%s219] sm:$0xf] 0.0
          %225 = vst [vmem:[%s219 + $0x4] sm:$0xf] 0.0
          %226 = vst [vmem:[%s219 + $0x8] sm:$0xf] 0.0
          %227 = vst [vmem:[%s219 + $0xc] sm:$0xf] 0.0
        $region40: #{tpu_custom_call.1} parent=27 // pred_fallthru
          _
        %v228 = vld [vmem:[%s185] sm:$0xff]
        %v229 = vld [vmem:[%s185 + $0x8] sm:$0xff]
        %v230 = vld [vmem:[%s185 + $0x10] sm:$0xff]
        %v231 = vld [vmem:[%s185 + $0x18] sm:$0xff]
        %v232 = vld [vmem:[%s194] sm:$0xff]
        %v233 = vld [vmem:[%s194 + $0x8] sm:$0xff]
        %v234 = vld [vmem:[%s194 + $0x10] sm:$0xff]
        %v235 = vld [vmem:[%s194 + $0x18] sm:$0xff]
        %v236 = vand.u32 2147483647, %v228
        %v237 = vand.u32 2147483647, %v229
        %v238 = vand.u32 2147483647, %v230
        %v239 = vand.u32 2147483647, %v231
        %v240 = vmul.f32 %v236, 0.5
        %v241 = vmul.f32 %v237, 0.5
        %v242 = vmul.f32 %v238, 0.5
        %v243 = vmul.f32 %v239, 0.5
        %v244 = vtanh.pop %v240
        %v245 = vtanh.pop %v241
        %v246 = vtanh.pop %v242
        %v247 = vtanh.pop %v243
        %v248 = vmul.f32 %v244, 0.5
        %v249 = vmul.f32 %v245, 0.5
        %v250 = vmul.f32 %v246, 0.5
        %v251 = vmul.f32 %v247, 0.5
        %v252 = vadd.f32 %v248, 0.5
        %v253 = vadd.f32 %v249, 0.5
        %v254 = vadd.f32 %v250, 0.5
        %v255 = vadd.f32 %v251, 0.5
        %vm256 = vcmp.ge.f32.partialorder %v228, 0.0
        %vm257 = vcmp.ge.f32.partialorder %v229, 0.0
        %vm258 = vcmp.ge.f32.partialorder %v230, 0.0
        %vm259 = vcmp.ge.f32.partialorder %v231, 0.0
        %v260 = vsub.f32 1.0, %v252
        %v261 = vsub.f32 1.0, %v253
        %v262 = vsub.f32 1.0, %v254
        %v263 = vsub.f32 1.0, %v255
        %v264 = vsel %vm256, %v252, %v260
        %v265 = vsel %vm257, %v253, %v261
        %v266 = vsel %vm258, %v254, %v262
        %v267 = vsel %vm259, %v255, %v263
        %v268 = vmax.f32 %v228, 0.0
        %v269 = vmax.f32 %v229, 0.0
        %v270 = vmax.f32 %v230, 0.0
        %v271 = vmax.f32 %v231, 0.0
        %v272 = vmul.f32 %v228, %v232
        %v273 = vmul.f32 %v229, %v233
        %v274 = vmul.f32 %v230, %v234
        %v275 = vmul.f32 %v231, %v235
        %v276 = vsub.f32 %v268, %v272
        %v277 = vsub.f32 %v269, %v273
        %v278 = vsub.f32 %v270, %v274
        %v279 = vsub.f32 %v271, %v275
        %v280 = vlog2.pop %v252
        %v281 = vmul.f32 %v280, 0.6931472
        %v282 = vlog2.pop %v253
        %v283 = vmul.f32 %v282, 0.6931472
        %v284 = vlog2.pop %v254
        %v285 = vmul.f32 %v284, 0.6931472
        %v286 = vlog2.pop %v255
        %v287 = vmul.f32 %v286, 0.6931472
        %v288 = vsub.f32 %v276, %v281
        %v289 = vsub.f32 %v277, %v283
        %v290 = vsub.f32 %v278, %v285
        %v291 = vsub.f32 %v279, %v287
        %vm292 = vcmp.ne.f32.partialorder %v232, -100.0
        %vm293 = vcmp.ne.f32.partialorder %v233, -100.0
        %vm294 = vcmp.ne.f32.partialorder %v234, -100.0
        %vm295 = vcmp.ne.f32.partialorder %v235, -100.0
        %v296 = vsel %vm292, %v288, 0.0
        %v297 = vsel %vm293, %v289, 0.0
        %v298 = vsel %vm294, %v290, 0.0
        %v299 = vsel %vm295, %v291, 0.0
        %v300 = vmul.f32 %v264, %v232
        %v301 = vmul.f32 %v265, %v233
        %v302 = vmul.f32 %v266, %v234
        %v303 = vmul.f32 %v267, %v235
        %v304 = vld [vmem:[%s219] sm:$0xf]
        %v305 = vrot.slane %v300, 4
        %v306 = vadd.f32 %v300, %v305
        %v307 = vrot.slane %v306, 2
        %v308 = vadd.f32 %v306, %v307
        %v309 = vrot.slane %v308, 1
        %v310 = vadd.f32 %v308, %v309
        %v311 = vrot.slane %v301, 4
        %v312 = vadd.f32 %v301, %v311
        %v313 = vrot.slane %v312, 2
        %v314 = vadd.f32 %v312, %v313
        %v315 = vrot.slane %v314, 1
        %v316 = vadd.f32 %v314, %v315
        %v317 = vrot.slane %v302, 4
        %v318 = vadd.f32 %v302, %v317
        %v319 = vrot.slane %v318, 2
        %v320 = vadd.f32 %v318, %v319
        %v321 = vrot.slane %v320, 1
        %v322 = vadd.f32 %v320, %v321
        %v323 = vrot.slane %v303, 4
        %v324 = vadd.f32 %v303, %v323
        %v325 = vrot.slane %v324, 2
        %v326 = vadd.f32 %v324, %v325
        %v327 = vrot.slane %v326, 1
        %v328 = vadd.f32 %v326, %v327
        %vm333 = vcmask 1041409
        %v334 = vsel %vm333, %v316, %v310
        %vm335 = vcmask 1042434
        %v336 = vsel %vm335, %v322, %v334
        %vm337 = vcmask 1043459
        %v338 = vsel %vm337, %v328, %v336
        %v340 = vadd.f32 %v304, %v338
        %341 = vst [vmem:[%s219] sm:$0xf] %v340
        %s342 = scalar_lea.vmem %s219, 4 [#allocation7]
        %v343 = vld [vmem:[%s342] sm:$0xf]
        %v344 = vrot.slane %v264, 4
        %v345 = vadd.f32 %v264, %v344
        %v346 = vrot.slane %v345, 2
        %v347 = vadd.f32 %v345, %v346
        %v348 = vrot.slane %v347, 1
        %v349 = vadd.f32 %v347, %v348
        %v350 = vrot.slane %v265, 4
        %v351 = vadd.f32 %v265, %v350
        %v352 = vrot.slane %v351, 2
        %v353 = vadd.f32 %v351, %v352
        %v354 = vrot.slane %v353, 1
        %v355 = vadd.f32 %v353, %v354
        %v356 = vrot.slane %v266, 4
        %v357 = vadd.f32 %v266, %v356
        %v358 = vrot.slane %v357, 2
        %v359 = vadd.f32 %v357, %v358
        %v360 = vrot.slane %v359, 1
        %v361 = vadd.f32 %v359, %v360
        %v362 = vrot.slane %v267, 4
        %v363 = vadd.f32 %v267, %v362
        %v364 = vrot.slane %v363, 2
        %v365 = vadd.f32 %v363, %v364
        %v366 = vrot.slane %v365, 1
        %v367 = vadd.f32 %v365, %v366
        %v372 = vsel %vm333, %v355, %v349
        %v373 = vsel %vm335, %v361, %v372
        %v374 = vsel %vm337, %v367, %v373
        %v376 = vadd.f32 %v343, %v374
        %377 = vst [vmem:[%s342] sm:$0xf] %v376
        %s378 = scalar_lea.vmem %s219, 8 [#allocation7]
        %v379 = vld [vmem:[%s378] sm:$0xf]
        %v380 = vrot.slane %v232, 4
        %v381 = vadd.f32 %v232, %v380
        %v382 = vrot.slane %v381, 2
        %v383 = vadd.f32 %v381, %v382
        %v384 = vrot.slane %v383, 1
        %v385 = vadd.f32 %v383, %v384
        %v386 = vrot.slane %v233, 4
        %v387 = vadd.f32 %v233, %v386
        %v388 = vrot.slane %v387, 2
        %v389 = vadd.f32 %v387, %v388
        %v390 = vrot.slane %v389, 1
        %v391 = vadd.f32 %v389, %v390
        %v392 = vrot.slane %v234, 4
        %v393 = vadd.f32 %v234, %v392
        %v394 = vrot.slane %v393, 2
        %v395 = vadd.f32 %v393, %v394
        %v396 = vrot.slane %v395, 1
        %v397 = vadd.f32 %v395, %v396
        %v398 = vrot.slane %v235, 4
        %v399 = vadd.f32 %v235, %v398
        %v400 = vrot.slane %v399, 2
        %v401 = vadd.f32 %v399, %v400
        %v402 = vrot.slane %v401, 1
        %v403 = vadd.f32 %v401, %v402
        %v408 = vsel %vm333, %v391, %v385
        %v409 = vsel %vm335, %v397, %v408
        %v410 = vsel %vm337, %v403, %v409
        %v412 = vadd.f32 %v379, %v410
        %413 = vst [vmem:[%s378] sm:$0xf] %v412
        %s414 = scalar_lea.vmem %s219, 12 [#allocation7]
        %v415 = vld [vmem:[%s414] sm:$0xf]
        %v416 = vrot.slane %v296, 4
        %v417 = vadd.f32 %v296, %v416
        %v418 = vrot.slane %v417, 2
        %v419 = vadd.f32 %v417, %v418
        %v420 = vrot.slane %v419, 1
        %v421 = vadd.f32 %v419, %v420
        %v422 = vrot.slane %v297, 4
        %v423 = vadd.f32 %v297, %v422
        %v424 = vrot.slane %v423, 2
        %v425 = vadd.f32 %v423, %v424
        %v426 = vrot.slane %v425, 1
        %v427 = vadd.f32 %v425, %v426
        %v428 = vrot.slane %v298, 4
        %v429 = vadd.f32 %v298, %v428
        %v430 = vrot.slane %v429, 2
        %v431 = vadd.f32 %v429, %v430
        %v432 = vrot.slane %v431, 1
        %v433 = vadd.f32 %v431, %v432
        %v434 = vrot.slane %v299, 4
        %v435 = vadd.f32 %v299, %v434
        %v436 = vrot.slane %v435, 2
        %v437 = vadd.f32 %v435, %v436
        %v438 = vrot.slane %v437, 1
        %v439 = vadd.f32 %v437, %v438
        %v444 = vsel %vm333, %v427, %v421
        %v445 = vsel %vm335, %v433, %v444
        %v446 = vsel %vm337, %v439, %v445
        %v448 = vadd.f32 %v415, %v446
        %449 = vst [vmem:[%s414] sm:$0xf] %v448
        %s450 = sand.u32 %s98, 1
        %s451 = scalar_lea.sflag [#allocation4], %s450
        %s452 = sand.u32 %s98, 1
        %s453 = smul.addr %s452, 16
        %s454 = scalar_lea.vmem [#allocation7], %s453
        // Predicated region
        $region41: #{tpu_custom_call.1} parent=27 // pred_check
          %p455 = pneg %p108
        $region42: #{tpu_custom_call.1} parent=27 // pred_check_branch
          %457 = sbr.rel (%p455) target = $region44
        $region43: #{tpu_custom_call.1} parent=27 // pred_region
          %s459 = ssub.s32 256, 256
          %460 = vsyncadd %s451, %s459
          %s461 = smul.addr %s26, 4
          %s462 = smul.addr %s461, 64
          %s463 = scalar_lea.hbm %s2, %s462
          %s464 = sshll.u32 %s454, 4
          %s465 = int_to_ptr.vmem [resolvable:$true] %s464
          %470 = dma.vmem_to_hbm [thread:$0]  %s465, 256, %s463, %s451, 64, 64, 4
        $region44: #{tpu_custom_call.1} parent=27 // pred_fallthru
          _
      $region28: #{tpu_custom_call.1} parent=5 // pred_fallthru
        _
      %p471 = scmp.le.s32.totalorder 2, %s17
      // Predicated region
      $region45: #{tpu_custom_call.1} parent=5 // pred_check
        %p472 = pneg %p471
      $region46: #{tpu_custom_call.1} parent=5 // pred_check_branch
        %474 = sbr.rel (%p472) target = $region48
      $region47: #{tpu_custom_call.1} parent=5 // pred_region
        %s475 = ssub.s32 %s17, 2
        // Predicated region
        $region49: #{tpu_custom_call.1} parent=47 // pred_check
          %p476 = pneg %p114
        $region50: #{tpu_custom_call.1} parent=47 // pred_check_branch
          %478 = sbr.rel (%p476) target = $region52
        $region51: #{tpu_custom_call.1} parent=47 // pred_region
          %s479 = sand.u32 %s99, 1
          %s480 = scalar_lea.sflag [#allocation4], %s479
          %s481 = sand.u32 %s99, 1
          %s482 = smul.addr %s481, 16
          %s483 = scalar_lea.vmem [#allocation7], %s482
          %484 = dma.done %s480, 256
        $region52: #{tpu_custom_call.1} parent=47 // pred_fallthru
          _
      $region48: #{tpu_custom_call.1} parent=5 // pred_fallthru
        _
    $region6: #{tpu_custom_call.1} parent=1 // loop_footer
      %s21 = sadd.s32 1, %s17
    $region7: #{tpu_custom_call.1} parent=1 // loop_footer_branch
      %16 = sbr.rel target = $region3
    $region8: #{tpu_custom_call.1} parent=1 // loop_exit
      _
    %485 = vsyncpa [#allocation3], 1
    %s486 = scalar_lea.sflag [#allocation3], 1
    %487 = vsyncpa %s486, 1
    %488 = vsyncpa [#allocation6], 1
    %s489 = scalar_lea.sflag [#allocation6], 1
    %490 = vsyncpa %s489, 1
    %491 = vsyncpa [#allocation4], 1
    %s492 = scalar_lea.sflag [#allocation4], 1
    %493 = vsyncpa %s492, 1

</llo_original>
